<compile_context>
chip_gen: v7x
topology: tpu7x:2x2x1
jax: 0.10.0
libtpu: 0.0.40
codegen_flags: <defaults>
</compile_context>

<pallas_src>
import functools
import numpy as np
import jax
import jax.numpy as jnp
from jax.experimental import pallas as pl
from jax.experimental.pallas import tpu as pltpu

LANE = 128
SUBLANE = 8

# ----------------------------------------------------------------------------
# Python-side reproduction of the weight preprocessing in unit_tcn.forward
# ----------------------------------------------------------------------------
sample_scheme_list = [[0, 2, 4, 6], [1, 3, 5, 7], [2, 4, 6, 8], [3, 5, 7, 0],
                      [4, 6, 8, 1], [5, 7, 0, 2], [6, 8, 1, 3], [7, 0, 2, 4]]


def gen_cavity():
    cavity_list = []
    for i in range(8):
        tmp = [0, 1, 2, 3, 4, 5, 6, 7, 8]
        for j in range(len(sample_scheme_list[i])):
            tmp[sample_scheme_list[i][j]] = 100
        while 100 in tmp:
            tmp.pop(tmp.index(100))
        cavity_list.append(tmp)
    return cavity_list


def quantize(w, inte_w, deci_w):
    # matches torch: *2^deci, truncate toward zero via .int(), clamp, /2^deci
    shift = 2 ** int(deci_w)
    upper = 2 ** int(deci_w + inte_w)
    q = jnp.trunc(w * shift)
    q = jnp.clip(q, -upper, upper)
    return q / shift


def preprocess_conv_weight(w_oik1, serial):
    """Apply the conv9x1 prune mask + quantize(5,10), as in unit_tcn.forward."""
    o_c, in_c, k, p = w_oik1.shape
    if k > 1 and serial in [0, 1, 2, 3, 4, 5, 6, 7, 8]:
        cavity_list = gen_cavity()
        mask = np.ones((o_c, in_c, k, p), dtype=np.float32)
        for j in range(0, 8):
            for i in range(j, in_c, 8):
                mask[:, i, cavity_list[j], :] = 0
        # TODO(synk): load_drop_list() reads '/home/winter/2s-AGCN/model/drop/L*.txt'
        # from disk; substituting a deterministic empty drop list here.
        drop_list = []
        if len(drop_list) > 0:
            mask[np.asarray(drop_list), :, :, :] = 0
        w_oik1 = w_oik1 * jnp.asarray(mask)
        w_oik1 = quantize(w_oik1, 5, 10)
    return w_oik1


def _round_up(a, m):
    return (a + m - 1) // m * m


def _vmem_budget():
    """Per-generation VMEM working-set budget + compiler vmem limit."""
    cap = 0
    try:
        info = pltpu.get_tpu_info()
        cap = int(getattr(info, "vmem_capacity_bytes", 0) or 0)
    except Exception:
        cap = 0
    if cap <= 0:
        cap = 64 * 1024 * 1024          # conservative default (v7x per-TC VMEM)
    vmem_limit = int(cap * 0.82)        # headroom for compiler internal scratch
    budget = vmem_limit // 2            # per-step working-set target
    return budget, vmem_limit


# ----------------------------------------------------------------------------
# Pass 1: temporal conv (fold-matmul accumulation) + per-block BN partial stats
# ----------------------------------------------------------------------------
def conv_stats_kernel(x_ref, w_ref, y_ref, stats_ref, *, n_folds, fold_step,
                      stride, t_out, t_out_p):
    # x_ref:     (bNV, S_len_p, C_lane)   -- tap-packed input slab
    # w_ref:     (n_folds, C_lane, Cout_p)
    # y_ref:     (bNV, T_out_p, Cout_p)   -- conv output (no bias; folded away)
    # stats_ref: (1, 2, Cout_p)           -- [sum, sum-of-squares] of valid rows
    bNV = y_ref.shape[0]
    c_lane = x_ref.shape[2]
    cout_p = y_ref.shape[2]
    m = bNV * t_out_p

    acc = jnp.zeros((m, cout_p), jnp.float32)
    for j in range(n_folds):                     # static unroll (<= 9 folds)
        start = j * fold_step
        if stride == 1:
            xw = x_ref[:, pl.ds(start, t_out_p), :]
        else:
            # TODO(synk): strided sublane window (stride > 1) is not exercised
            # by the test; restructure the T layout in the wrapper for peak perf.
            xw = x_ref[:, pl.ds(start, t_out_p, stride), :]
        # T_out_p is a multiple of 8 and c_lane a multiple of 128, so this
        # reshape is a free view (no relayout copy).
        acc = acc + jnp.dot(xw.reshape(m, c_lane), w_ref[j],
                            preferred_element_type=jnp.float32)

    y_ref[...] = acc.reshape(bNV, t_out_p, cout_p).astype(y_ref.dtype)

    # BN partial stats.  Rows padded on the N*V axis are exactly zero (zero
    # input, no bias) so they contribute nothing; only padded t rows (if any,
    # decided statically) must be masked.
    if t_out_p != t_out:
        t_id = jax.lax.broadcasted_iota(jnp.int32, (1, t_out_p, 1), 1)
        accm = jnp.where(t_id < t_out, acc.reshape(bNV, t_out_p, cout_p), 0.0)
        accm = accm.reshape(m, cout_p)
    else:
        accm = acc
    s1 = jnp.sum(accm, axis=0, keepdims=True)            # (1, Cout_p)
    s2 = jnp.sum(accm * accm, axis=0, keepdims=True)     # (1, Cout_p)
    stats_ref[0, :, :] = jnp.concatenate([s1, s2], axis=0)


# ----------------------------------------------------------------------------
# Pass 2: apply BatchNorm (y * scale + shift), lane-dense, aliases its input
# ----------------------------------------------------------------------------
def bn_apply_kernel(y_ref, scale_ref, shift_ref, o_ref):
    o_ref[...] = y_ref[...] * scale_ref[...] + shift_ref[...]


# ----------------------------------------------------------------------------
# Wrapper
# ----------------------------------------------------------------------------
def unit_tcn_forward(x_nchw, w_oik1, bias, gamma, beta, *, serial,
                     kernel_size=9, stride=1, eps=1e-5, block_rows=None):
    """Pallas implementation of unit_tcn.forward. x_nchw: (N, C_in, T, V)."""
    N, Cin, T, V = x_nchw.shape
    K = kernel_size
    pad = (K - 1) // 2
    Cout = w_oik1.shape[0]
    T_out = (T + 2 * pad - K) // stride + 1
    NV = N * V

    # Tap-packing factor: interleave F adjacent time steps on the 128-lane axis
    # when that costs no extra HBM bytes vs. zero-padding Cin to 128.
    if Cin < LANE and LANE % Cin == 0:
        F = LANE // Cin
        C_lane = LANE
    else:
        F = 1
        C_lane = _round_up(Cin, LANE)
    n_folds = -(-K // F)
    Cout_p = _round_up(Cout, LANE)

    # In-forward weight preprocessing (prune mask + quantize) -- plain JAX glue.
    # Weights stay fp32: quantize(5,10) needs more mantissa than bf16 provides.
    w_oik1 = preprocess_conv_weight(w_oik1, serial)
    w_kic = jnp.transpose(w_oik1[:, :, :, 0], (2, 1, 0)).astype(jnp.float32)  # (K,Cin,Cout)
    w_folds = jnp.zeros((n_folds, F, Cin, Cout_p), jnp.float32)
    for j in range(n_folds):
        for f in range(F):
            tap = j * F + f
            if tap < K:
                w_folds = w_folds.at[j, f, :, :Cout].set(w_kic[tap])
    w_folds = w_folds.reshape(n_folds, F * Cin, Cout_p)
    if F * Cin < C_lane:
        w_folds = jnp.pad(w_folds, ((0, 0), (0, C_lane - F * Cin), (0, 0)))

    # Sublane-aligned output-time extent and packed-slab extents.
    T_out_p = _round_up(T_out, SUBLANE)
    S_len = (T_out_p - 1) * stride + (n_folds - 1) * F + 1
    S_len_p = _round_up(S_len, SUBLANE)
    L2 = S_len_p + F - 1              # zero-padded (un-packed) time extent

    # Per-generation VMEM budget; row-block heuristic (no im2col temp anymore).
    budget, vmem_limit = _vmem_budget()
    bytes_per_row = 4 * (2 * S_len_p * C_lane + 3 * T_out_p * Cout_p)
    auto_rows = max(1, budget // bytes_per_row)
    auto_rows = min(auto_rows, max(1, -(-NV // 2)))   # >=2 blocks keeps the
    if block_rows is None:                            # 2nd v7x TC busy
        bNV = int(auto_rows)
    else:
        bNV = int(block_rows)
    bNV = max(1, min(bNV, NV))
    NV_pad = _round_up(NV, bNV)
    nb = NV_pad // bNV

    # NCHW -> channels-last rows (NV, T, Cin); zero-pad time halo / grid rows,
    # then interleave F adjacent time steps onto the lane axis ("tap packing").
    x_cl = jnp.transpose(x_nchw, (0, 3, 2, 1)).reshape(NV, T, Cin).astype(jnp.float32)
    x_time = jnp.zeros((NV_pad, L2, Cin), jnp.float32)
    x_time = x_time.at[:NV, pad:pad + T, :].set(x_cl)
    if F > 1:
        slab = jnp.stack([x_time[:, f:f + S_len_p, :] for f in range(F)], axis=2)
        slab = slab.reshape(NV_pad, S_len_p, F * Cin)
    else:
        slab = x_time[:, :S_len_p, :]
    if slab.shape[-1] < C_lane:
        slab = jnp.pad(slab, ((0, 0), (0, 0), (0, C_lane - slab.shape[-1])))

    kernel1 = functools.partial(conv_stats_kernel, n_folds=n_folds, fold_step=F,
                                stride=stride, t_out=T_out, t_out_p=T_out_p)
    y_pad, stats = pl.pallas_call(
        kernel1,
        out_shape=(jax.ShapeDtypeStruct((NV_pad, T_out_p, Cout_p), jnp.float32),
                   jax.ShapeDtypeStruct((nb, 2, Cout_p), jnp.float32)),
        grid_spec=pltpu.PrefetchScalarGridSpec(
            num_scalar_prefetch=0,
            grid=(nb,),
            in_specs=[
                pl.BlockSpec((bNV, S_len_p, C_lane), lambda i: (i, 0, 0)),
                pl.BlockSpec((n_folds, C_lane, Cout_p), lambda i: (0, 0, 0)),
            ],
            out_specs=(
                pl.BlockSpec((bNV, T_out_p, Cout_p), lambda i: (i, 0, 0)),
                pl.BlockSpec((1, 2, Cout_p), lambda i: (i, 0, 0)),
            ),
        ),
        compiler_params=pltpu.CompilerParams(
            dimension_semantics=("parallel",),
            vmem_limit_bytes=vmem_limit),
    )(slab, w_folds)

    # Tiny cross-block reduction + BN scale/shift derivation (plain JAX).
    # BatchNorm2d training mode: biased batch stats over (N, T, V) per channel.
    # The conv bias cancels exactly under batch-stat BN (it is subtracted back
    # out with the mean), so it is folded away instead of added in the kernel.
    _ = bias
    count = jnp.float32(NV * T_out)
    s1 = jnp.sum(stats[:, 0, :], axis=0)
    s2 = jnp.sum(stats[:, 1, :], axis=0)
    mean = s1 / count
    var = jnp.maximum(s2 / count - mean * mean, 0.0)   # fp32; guard cancellation
    g2 = jnp.zeros((Cout_p,), jnp.float32).at[:Cout].set(gamma.astype(jnp.float32))
    beta2 = jnp.zeros((Cout_p,), jnp.float32).at[:Cout].set(beta.astype(jnp.float32))
    scale = g2 * jax.lax.rsqrt(var + eps)
    shift = beta2 - mean * scale
    # TODO(synk): BatchNorm2d running_mean/running_var buffers are not updated
    # (training-state side effect outside the forward math).

    # Pass 2: pure elementwise, HBM-bound -> flatten and use a large row block.
    rows = NV_pad * T_out_p
    y2 = y_pad.reshape(rows, Cout_p)
    target = max(SUBLANE, (budget // (Cout_p * 4 * 4)) // SUBLANE * SUBLANE)
    if rows >= 2 * SUBLANE:
        target = min(target, max(SUBLANE, (rows // 2) // SUBLANE * SUBLANE))
    target = min(target, rows)
    R2 = int(target)
    while rows % R2 != 0:              # rows is a multiple of 8 -> terminates
        R2 -= SUBLANE
    nb2 = rows // R2

    out2 = pl.pallas_call(
        bn_apply_kernel,
        out_shape=jax.ShapeDtypeStruct((rows, Cout_p), jnp.float32),
        grid_spec=pltpu.PrefetchScalarGridSpec(
            num_scalar_prefetch=0,
            grid=(nb2,),
            in_specs=[
                pl.BlockSpec((R2, Cout_p), lambda i: (i, 0)),
                pl.BlockSpec((1, Cout_p), lambda i: (0, 0)),
                pl.BlockSpec((1, Cout_p), lambda i: (0, 0)),
            ],
            out_specs=pl.BlockSpec((R2, Cout_p), lambda i: (i, 0)),
        ),
        input_output_aliases={0: 0},
        compiler_params=pltpu.CompilerParams(
            dimension_semantics=("parallel",),
            vmem_limit_bytes=vmem_limit),
    )(y2, scale.reshape(1, Cout_p), shift.reshape(1, Cout_p))

    # (rows, Cout_p) -> (N, V, T_out, Cout) -> NCHW (N, Cout, T_out, V)
    out = out2.reshape(NV_pad, T_out_p, Cout_p)[:NV, :T_out, :Cout]
    out = out.reshape(N, V, T_out, Cout)
    return jnp.transpose(out, (0, 3, 2, 1))


# ----------------------------------------------------------------------------
# Pure-JAX reference (for correctness check only)
# ----------------------------------------------------------------------------
def reference_forward(x_nchw, w_oik1, bias, gamma, beta, *, serial,
                      kernel_size=9, stride=1, eps=1e-5):
    pad = (kernel_size - 1) // 2
    w_oik1 = preprocess_conv_weight(w_oik1, serial)
    y = jax.lax.conv_general_dilated(
        x_nchw.astype(jnp.float32), w_oik1.astype(jnp.float32),
        window_strides=(stride, 1), padding=((pad, pad), (0, 0)),
        dimension_numbers=('NCHW', 'OIHW', 'NCHW'))
    y = y + bias[None, :, None, None]
    mean = jnp.mean(y, axis=(0, 2, 3), keepdims=True)
    var = jnp.mean(jnp.square(y - mean), axis=(0, 2, 3), keepdims=True)
    return (y - mean) * jax.lax.rsqrt(var + eps) * gamma[None, :, None, None] \
        + beta[None, :, None, None]


# ----------------------------------------------------------------------------
if __name__ == "__main__":
    key = jax.random.PRNGKey(0)
    kx, kw = jax.random.split(key)

    # Small shapes consistent with unit_tcn: NCHW = (N, C_in, T, V)
    N, Cin, T, V = 2, 4, 16, 16
    Cout, K, stride, serial = 8, 9, 1, 0

    x = jax.random.normal(kx, (N, Cin, T, V), dtype=jnp.float32)

    # conv_init: kaiming_normal fan_out (std = sqrt(2 / (Cout*K*1))), bias = 0
    fan_out = Cout * K * 1
    w = jax.random.normal(kw, (Cout, Cin, K, 1), dtype=jnp.float32) \
        * jnp.sqrt(2.0 / fan_out)
    bias = jnp.zeros((Cout,), dtype=jnp.float32)
    # bn_init(bn, 1): gamma = 1, beta = 0
    gamma = jnp.ones((Cout,), dtype=jnp.float32)
    beta = jnp.zeros((Cout,), dtype=jnp.float32)

    fwd = jax.jit(functools.partial(unit_tcn_forward, serial=serial,
                                    kernel_size=K, stride=stride,
                                    block_rows=8))  # 4 row-blocks exercised
    out = jax.block_until_ready(fwd(x, w, bias, gamma, beta))

    ref = jax.block_until_ready(
        reference_forward(x, w, bias, gamma, beta, serial=serial,
                          kernel_size=K, stride=stride))

    assert out.shape == (N, Cout, T, V), out.shape
    np.testing.assert_allclose(np.asarray(out), np.asarray(ref),
                               rtol=1e-4, atol=1e-4)
    print("KERNEL_OK")
</pallas_src>

<mosaic_0001>
module attributes {stable_mosaic.version = 11 : i64} {
  func.func @conv_stats_kernel(%arg0: i32, %arg1: memref<8x16x128xf32, #tpu.memory_space<vmem>>, %arg2: memref<1x128x128xf32, #tpu.memory_space<vmem>>, %arg3: memref<8x16x128xf32, #tpu.memory_space<vmem>>, %arg4: memref<1x2x128xf32, #tpu.memory_space<vmem>>) attributes {dimension_semantics = [#tpu.dimension_semantics<parallel>], iteration_bounds = array<i64: 4>, scalar_prefetch = 0 : i64, scratch_operands = 0 : i64, tpu.core_type = #tpu.core_type<tc>, window_params = [{transform_indices = @transform_0, window_bounds = array<i64: 8, 16, 128>}, {pipeline_mode = #tpu.pipeline_mode<synchronous>, transform_indices = @transform_1, window_bounds = array<i64: 1, 128, 128>}, {transform_indices = @transform_2, window_bounds = array<i64: 8, 16, 128>}, {transform_indices = @transform_3, window_bounds = array<i64: 1, 2, 128>}]} {
    %cst = arith.constant 0.000000e+00 : f32
    %0 = vector.broadcast %cst : f32 to vector<128x128xf32>
    %c0 = arith.constant 0 : index
    %c0_0 = arith.constant 0 : index
    %c0_1 = arith.constant 0 : index
    %1 = vector.load %arg1[%c0, %c0_0, %c0_1] : memref<8x16x128xf32, #tpu.memory_space<vmem>>, vector<8x16x128xf32>
    %2 = vector.shape_cast %1 : vector<8x16x128xf32> to vector<128x128xf32>
    %c0_2 = arith.constant 0 : index
    %c0_3 = arith.constant 0 : index
    %c0_4 = arith.constant 0 : index
    %3 = vector.load %arg2[%c0_2, %c0_3, %c0_4] : memref<1x128x128xf32, #tpu.memory_space<vmem>>, vector<1x128x128xf32>
    %4 = vector.shape_cast %3 : vector<1x128x128xf32> to vector<128x128xf32>
    %cst_5 = arith.constant dense<0.000000e+00> : vector<128x128xf32>
    %5 = tpu.matmul %2, %4, %cst_5 {dimension_numbers = #tpu.dot_dimension_numbers<[1], [0], [0], [1], [0, 0, 1, 1], [], []>} : vector<128x128xf32>, vector<128x128xf32>, vector<128x128xf32> -> vector<128x128xf32>
    %6 = arith.addf %0, %5 : vector<128x128xf32>
    %7 = vector.shape_cast %6 : vector<128x128xf32> to vector<8x16x128xf32>
    %c0_6 = arith.constant 0 : index
    %c0_7 = arith.constant 0 : index
    %c0_8 = arith.constant 0 : index
    %8 = vector.load %arg3[%c0_6, %c0_7, %c0_8] : memref<8x16x128xf32, #tpu.memory_space<vmem>>, vector<8x16x128xf32>
    tpu.vector_store %arg3[%c0_6, %c0_7, %c0_8], %7 {strides = array<i32>} : memref<8x16x128xf32, #tpu.memory_space<vmem>>, vector<8x16x128xf32>,
    %cst_9 = arith.constant dense<0.000000e+00> : vector<128xf32>
    %9 = vector.multi_reduction <add>, %6, %cst_9 [0] : vector<128x128xf32> to vector<128xf32>
    %10 = vector.shape_cast %9 : vector<128xf32> to vector<1x128xf32>
    %11 = arith.mulf %6, %6 : vector<128x128xf32>
    %cst_10 = arith.constant dense<0.000000e+00> : vector<128xf32>
    %12 = vector.multi_reduction <add>, %11, %cst_10 [0] : vector<128x128xf32> to vector<128xf32>
    %13 = vector.shape_cast %12 : vector<128xf32> to vector<1x128xf32>
    %14 = tpu.concatenate %10, %13 in 0 : vector<1x128xf32>, vector<1x128xf32> -> vector<2x128xf32>
    %c0_11 = arith.constant 0 : index
    %c0_12 = arith.constant 0 : index
    %c0_13 = arith.constant 0 : index
    %15 = vector.load %arg4[%c0_11, %c0_12, %c0_13] : memref<1x2x128xf32, #tpu.memory_space<vmem>>, vector<1x2x128xf32>
    %16 = vector.shape_cast %15 : vector<1x2x128xf32> to vector<2x128xf32>
    %17 = vector.shape_cast %14 : vector<2x128xf32> to vector<1x2x128xf32>
    tpu.vector_store %arg4[%c0_11, %c0_12, %c0_13], %17 {strides = array<i32>} : memref<1x2x128xf32, #tpu.memory_space<vmem>>, vector<1x2x128xf32>,
    return
  }
  func.func @transform_0(%arg0: i32) -> (i32, i32, i32) {
    %c0_i32 = arith.constant 0 : i32
    %c0_i32_0 = arith.constant 0 : i32
    %c0_i32_1 = arith.constant 0 : i32
    return %arg0, %c0_i32, %c0_i32_0 : i32, i32, i32
  }
  func.func @transform_1(%arg0: i32) -> (i32, i32, i32) {
    %c0_i32 = arith.constant 0 : i32
    %c0_i32_0 = arith.constant 0 : i32
    %c0_i32_1 = arith.constant 0 : i32
    %c0_i32_2 = arith.constant 0 : i32
    return %c0_i32, %c0_i32_0, %c0_i32_1 : i32, i32, i32
  }
  func.func @transform_2(%arg0: i32) -> (i32, i32, i32) {
    %c0_i32 = arith.constant 0 : i32
    %c0_i32_0 = arith.constant 0 : i32
    %c0_i32_1 = arith.constant 0 : i32
    return %arg0, %c0_i32, %c0_i32_0 : i32, i32, i32
  }
  func.func @transform_3(%arg0: i32) -> (i32, i32, i32) {
    %c0_i32 = arith.constant 0 : i32
    %c0_i32_0 = arith.constant 0 : i32
    %c0_i32_1 = arith.constant 0 : i32
    return %arg0, %c0_i32, %c0_i32_0 : i32, i32, i32
  }
}

module attributes {stable_mosaic.version = 11 : i64} {
  func.func @bn_apply_kernel(%arg0: i32, %arg1: memref<256x128xf32, #tpu.memory_space<vmem>>, %arg2: memref<1x128xf32, #tpu.memory_space<vmem>>, %arg3: memref<1x128xf32, #tpu.memory_space<vmem>>, %arg4: memref<256x128xf32, #tpu.memory_space<vmem>>) attributes {dimension_semantics = [#tpu.dimension_semantics<parallel>], iteration_bounds = array<i64: 2>, scalar_prefetch = 0 : i64, scratch_operands = 0 : i64, tpu.core_type = #tpu.core_type<tc>, window_params = [{transform_indices = @transform_0, window_bounds = array<i64: 256, 128>}, {pipeline_mode = #tpu.pipeline_mode<synchronous>, transform_indices = @transform_1, window_bounds = array<i64: 1, 128>}, {pipeline_mode = #tpu.pipeline_mode<synchronous>, transform_indices = @transform_2, window_bounds = array<i64: 1, 128>}, {transform_indices = @transform_3, window_bounds = array<i64: 256, 128>}]} {
    %c0 = arith.constant 0 : index
    %c0_0 = arith.constant 0 : index
    %0 = vector.load %arg1[%c0, %c0_0] : memref<256x128xf32, #tpu.memory_space<vmem>>, vector<256x128xf32>
    %c0_1 = arith.constant 0 : index
    %c0_2 = arith.constant 0 : index
    %1 = vector.load %arg2[%c0_1, %c0_2] : memref<1x128xf32, #tpu.memory_space<vmem>>, vector<1x128xf32>
    %2 = vector.broadcast %1 : vector<1x128xf32> to vector<256x128xf32>
    %3 = arith.mulf %0, %2 : vector<256x128xf32>
    %c0_3 = arith.constant 0 : index
    %c0_4 = arith.constant 0 : index
    %4 = vector.load %arg3[%c0_3, %c0_4] : memref<1x128xf32, #tpu.memory_space<vmem>>, vector<1x128xf32>
    %5 = vector.broadcast %4 : vector<1x128xf32> to vector<256x128xf32>
    %6 = arith.addf %3, %5 : vector<256x128xf32>
    %c0_5 = arith.constant 0 : index
    %c0_6 = arith.constant 0 : index
    %7 = vector.load %arg4[%c0_5, %c0_6] : memref<256x128xf32, #tpu.memory_space<vmem>>, vector<256x128xf32>
    tpu.vector_store %arg4[%c0_5, %c0_6], %6 {strides = array<i32>} : memref<256x128xf32, #tpu.memory_space<vmem>>, vector<256x128xf32>,
    return
  }
  func.func @transform_0(%arg0: i32) -> (i32, i32) {
    %c0_i32 = arith.constant 0 : i32
    %c0_i32_0 = arith.constant 0 : i32
    return %arg0, %c0_i32 : i32, i32
  }
  func.func @transform_1(%arg0: i32) -> (i32, i32) {
    %c0_i32 = arith.constant 0 : i32
    %c0_i32_0 = arith.constant 0 : i32
    %c0_i32_1 = arith.constant 0 : i32
    return %c0_i32, %c0_i32_0 : i32, i32
  }
  func.func @transform_2(%arg0: i32) -> (i32, i32) {
    %c0_i32 = arith.constant 0 : i32
    %c0_i32_0 = arith.constant 0 : i32
    %c0_i32_1 = arith.constant 0 : i32
    return %c0_i32, %c0_i32_0 : i32, i32
  }
  func.func @transform_3(%arg0: i32) -> (i32, i32) {
    %c0_i32 = arith.constant 0 : i32
    %c0_i32_0 = arith.constant 0 : i32
    return %arg0, %c0_i32 : i32, i32
  }
}

</mosaic_0001>

<llo_original>
// kernel: unit_tcn_forward.2
$region0: #{unit_tcn_forward.2}
  #allocation0 [shape = 'u32[]', space=smem, size = 0x4, offset = 0x4, fixed_abs, tag = 'smem constant byte address 0x4 - core index']
  #allocation1 [shape = 'u32[144,128]{1,0:T(1,128)}', space=vmem, size = 0x12000, scoped, tag = 'internal scratch']
  %s0 = inlined_call_operand.vmem [shape: f32[32,16,128], index: 0, kind: input, shape index: {}]
  %s1 = inlined_call_operand.vmem [shape: f32[1,128,128], index: 1, kind: input, shape index: {}]
  %s2 = inlined_call_operand.vmem [shape: f32[32,16,128], index: 2, kind: output, shape index: {0}]
  %s3 = inlined_call_operand.vmem [shape: f32[4,2,128], index: 3, kind: output, shape index: {1}]
  %4 = xla_tuple %s2, %s3
  %s5 = sld [smem:[#allocation0]]
  $region49: #{unit_tcn_forward.2} parent=0
    _
  %s7 = ssub.s32 1, %s5
  %s8 = scalar_select 0, %s7, %s5
  loop: start=0, step=1, limit=6
  $region2: #{unit_tcn_forward.2} parent=0 // loop_pre_header
    _
  $region3: #{unit_tcn_forward.2} parent=0 // loop_header
    %s10 = sphi 0, %s14
    %p11 = scmp.ge.s32.totalorder %s10, 6
    %s20 = sphi 0, %s22
    %s23 = sphi 0, %s20
    %s24 = sphi 0, %s23
    %s40 = sphi 0, %s24
    %s44 = sphi 0, %s44
    %s46 = sphi 0, %s44
    %s47 = sphi 0, %s46
    %s61 = sphi 0, %s47
    %s67 = sphi 0, %s69
    %s70 = sphi 0, %s67
    %s71 = sphi 0, %s70
    %s87 = sphi 0, %s71
    %s93 = sphi 0, %s95
    %s96 = sphi 0, %s93
    %s97 = sphi 0, %s96
    %s113 = sphi 0, %s97
  $region4: #{unit_tcn_forward.2} parent=0 // loop_header_branch
    %13 = sbr.rel (%p11) target = $region8
  $region5: #{unit_tcn_forward.2} parent=0 // loop_body
    %s15 = ssub.s32 %s10, 1
    %s16 = ssub.s32 %s10, 2
    %s17 = sadd.s32 %s10, 1
    %s18 = ssub.s32 %s10, %s17
    %p19 = scmp.eq.s32.totalorder %s18, 0
    %s21 = sadd.s32 %s20, 1
    %s22 = scalar_select %p19, %s20, %s21
    %p25 = pneg %p19
    %p26 = scmp.eq.s32.totalorder %s10, 3
    %p27 = por %p25, %p26
    %p28 = scmp.ne.s32.totalorder %s20, %s23
    %p29 = scmp.eq.s32.totalorder %s10, 0
    %p30 = por %p28, %p29
    %p31 = scmp.ne.s32.totalorder %s20, %s23
    %p32 = scmp.eq.s32.totalorder %s15, 3
    %p33 = por %p31, %p32
    %p34 = scmp.ne.s32.totalorder %s23, %s24
    %p35 = scmp.eq.s32.totalorder %s15, 0
    %p36 = por %p34, %p35
    %p37 = scmp.ne.s32.totalorder %s23, %s24
    %p38 = scmp.eq.s32.totalorder %s16, 3
    %p39 = por %p37, %p38
    %p41 = scmp.ne.s32.totalorder %s24, %s40
    %p42 = scmp.eq.s32.totalorder %s16, 0
    %p43 = por %p41, %p42
    %s45 = sadd.s32 %s44, 1
    %p48 = scmp.eq.s32.totalorder %s10, 3
    %p49 = scmp.ne.s32.totalorder %s44, %s46
    %p50 = scmp.eq.s32.totalorder %s10, 0
    %p51 = por %p49, %p50
    %p52 = scmp.ne.s32.totalorder %s44, %s46
    %p53 = scmp.eq.s32.totalorder %s15, 3
    %p54 = por %p52, %p53
    %p55 = scmp.ne.s32.totalorder %s46, %s47
    %p56 = scmp.eq.s32.totalorder %s15, 0
    %p57 = por %p55, %p56
    %p58 = scmp.ne.s32.totalorder %s46, %s47
    %p59 = scmp.eq.s32.totalorder %s16, 3
    %p60 = por %p58, %p59
    %p62 = scmp.ne.s32.totalorder %s47, %s61
    %p63 = scmp.eq.s32.totalorder %s16, 0
    %p64 = por %p62, %p63
    %s65 = ssub.s32 %s10, %s17
    %p66 = scmp.eq.s32.totalorder %s65, 0
    %s68 = sadd.s32 %s67, 1
    %s69 = scalar_select %p66, %s67, %s68
    %p72 = pneg %p66
    %p73 = scmp.eq.s32.totalorder %s10, 3
    %p74 = por %p72, %p73
    %p75 = scmp.ne.s32.totalorder %s67, %s70
    %p76 = scmp.eq.s32.totalorder %s10, 0
    %p77 = por %p75, %p76
    %p78 = scmp.ne.s32.totalorder %s67, %s70
    %p79 = scmp.eq.s32.totalorder %s15, 3
    %p80 = por %p78, %p79
    %p81 = scmp.ne.s32.totalorder %s70, %s71
    %p82 = scmp.eq.s32.totalorder %s15, 0
    %p83 = por %p81, %p82
    %p84 = scmp.ne.s32.totalorder %s70, %s71
    %p85 = scmp.eq.s32.totalorder %s16, 3
    %p86 = por %p84, %p85
    %p88 = scmp.ne.s32.totalorder %s71, %s87
    %p89 = scmp.eq.s32.totalorder %s16, 0
    %p90 = por %p88, %p89
    %s91 = ssub.s32 %s10, %s17
    %p92 = scmp.eq.s32.totalorder %s91, 0
    %s94 = sadd.s32 %s93, 1
    %s95 = scalar_select %p92, %s93, %s94
    %p98 = pneg %p92
    %p99 = scmp.eq.s32.totalorder %s10, 3
    %p100 = por %p98, %p99
    %p101 = scmp.ne.s32.totalorder %s93, %s96
    %p102 = scmp.eq.s32.totalorder %s10, 0
    %p103 = por %p101, %p102
    %p104 = scmp.ne.s32.totalorder %s93, %s96
    %p105 = scmp.eq.s32.totalorder %s15, 3
    %p106 = por %p104, %p105
    %p107 = scmp.ne.s32.totalorder %s96, %s97
    %p108 = scmp.eq.s32.totalorder %s15, 0
    %p109 = por %p107, %p108
    %p110 = scmp.ne.s32.totalorder %s96, %s97
    %p111 = scmp.eq.s32.totalorder %s16, 3
    %p112 = por %p110, %p111
    %p114 = scmp.ne.s32.totalorder %s97, %s113
    %p115 = scmp.eq.s32.totalorder %s16, 0
    %p116 = por %p114, %p115
    %p117 = scmp.le.s32.totalorder 1, %s10
    %p118 = scmp.lt.s32.totalorder %s10, 5
    %p119 = pnand %p117, %p118
    %p120 = pneg %p119
    // Predicated region
    $region9: #{unit_tcn_forward.2} parent=5 // pred_check
      _
    $region10: #{unit_tcn_forward.2} parent=5 // pred_check_branch
      %122 = sbr.rel (%p119) target = $region12
    $region11: #{unit_tcn_forward.2} parent=5 // pred_region
      %s123 = ssub.s32 %s10, 1
      // Predicated region
      $region13: #{unit_tcn_forward.2} parent=11 // pred_check
        %p124 = pneg %p57
      $region14: #{unit_tcn_forward.2} parent=11 // pred_check_branch
        %126 = sbr.rel (%p124) target = $region16
      $region15: #{unit_tcn_forward.2} parent=11 // pred_region
        _
      $region16: #{unit_tcn_forward.2} parent=11 // pred_fallthru
        _
    $region12: #{unit_tcn_forward.2} parent=5 // pred_fallthru
      _
    %p127 = scmp.lt.s32.totalorder %s10, 4
    // Predicated region
    $region17: #{unit_tcn_forward.2} parent=5 // pred_check
      %p128 = pneg %p127
    $region18: #{unit_tcn_forward.2} parent=5 // pred_check_branch
      %130 = sbr.rel (%p128) target = $region20
    $region19: #{unit_tcn_forward.2} parent=5 // pred_region
      // Predicated region
      $region21: #{unit_tcn_forward.2} parent=19 // pred_check
        %p131 = pneg %p30
      $region22: #{unit_tcn_forward.2} parent=19 // pred_check_branch
        %133 = sbr.rel (%p131) target = $region24
      $region23: #{unit_tcn_forward.2} parent=19 // pred_region
        %s134 = smul.u32 8, %s10
        %p135 = scmp.lt.s32.totalorder %s134, 31
        %s136 = scalar_select %p135, %s134, 31
        %s137 = smul.addr %s136, 2
        %s138 = smul.addr %s137, 8
        %s139 = scalar_lea.vmem %s0, %s138
        %s140 = smul.u32 8, %s10
      $region24: #{unit_tcn_forward.2} parent=19 // pred_fallthru
        _
    $region20: #{unit_tcn_forward.2} parent=5 // pred_fallthru
      _
    %p141 = scmp.le.s32.totalorder 1, %s10
    %p142 = scmp.lt.s32.totalorder %s10, 5
    %p143 = pnand %p141, %p142
    %p144 = pneg %p143
    // Predicated region
    $region25: #{unit_tcn_forward.2} parent=5 // pred_check
      _
    $region26: #{unit_tcn_forward.2} parent=5 // pred_check_branch
      %146 = sbr.rel (%p143) target = $region28
    $region27: #{unit_tcn_forward.2} parent=5 // pred_region
      %s147 = ssub.s32 %s10, 1
      %s148 = smul.u32 8, %s15
      %p149 = scmp.lt.s32.totalorder %s148, 31
      %s150 = scalar_select %p149, %s148, 31
      %s151 = smul.addr %s150, 2
      %s152 = smul.addr %s151, 8
      %s153 = scalar_lea.vmem %s0, %s152
      %p154 = pneg %p36
      %p155 = pneg %p33
      %p156 = pneg %p57
      %p157 = pneg %p54
      %p158 = pneg %p83
      %p159 = pneg %p80
      %s160 = smul.u32 8, %s15
      %p161 = scmp.lt.s32.totalorder %s160, 31
      %s162 = scalar_select %p161, %s160, 31
      %s163 = smul.addr %s162, 2
      %s164 = smul.addr %s163, 8
      %s165 = scalar_lea.vmem %s2, %s164
      %p166 = pneg %p109
      %p167 = pneg %p106
      %p168 = scmp.lt.s32.totalorder %s15, 3
      %s169 = scalar_select %p168, %s15, 3
      %s170 = smul.addr %s169, 2
      %s171 = scalar_lea.vmem %s3, %s170
      %s172 = smul.u32 8, %s15
      %p173 = scmp.lt.s32.totalorder %s172, 31
      %s174 = scalar_select %p173, %s172, 31
      %s175 = smul.addr %s174, 2
      %s176 = smul.addr %s175, 8
      %s177 = scalar_lea.vmem %s0, %s176
      %s178 = smul.u32 8, %s15
      %s179 = smul.u32 8, %s15
      %p180 = scmp.lt.s32.totalorder %s179, 31
      %s181 = scalar_select %p180, %s179, 31
      %s182 = smul.addr %s181, 2
      %s183 = smul.addr %s182, 8
      %s184 = scalar_lea.vmem %s2, %s183
      %s185 = smul.u32 8, %s15
      %p186 = scmp.lt.s32.totalorder %s15, 3
      %s187 = scalar_select %p186, %s15, 3
      %s188 = smul.addr %s187, 2
      %s189 = scalar_lea.vmem %s3, %s188
      %v190 = vld [vmem:[%s177] sm:$0xff]
      %v191 = vld [vmem:[%s177 + $0x8] sm:$0xff]
      %v192 = vld [vmem:[%s177 + $0x10] sm:$0xff]
      %v193 = vld [vmem:[%s177 + $0x18] sm:$0xff]
      %v194 = vld [vmem:[%s177 + $0x20] sm:$0xff]
      %v195 = vld [vmem:[%s177 + $0x28] sm:$0xff]
      %v196 = vld [vmem:[%s177 + $0x30] sm:$0xff]
      %v197 = vld [vmem:[%s177 + $0x38] sm:$0xff]
      %v198 = vld [vmem:[%s177 + $0x40] sm:$0xff]
      %v199 = vld [vmem:[%s177 + $0x48] sm:$0xff]
      %v200 = vld [vmem:[%s177 + $0x50] sm:$0xff]
      %v201 = vld [vmem:[%s177 + $0x58] sm:$0xff]
      %v202 = vld [vmem:[%s177 + $0x60] sm:$0xff]
      %v203 = vld [vmem:[%s177 + $0x68] sm:$0xff]
      %v204 = vld [vmem:[%s177 + $0x70] sm:$0xff]
      %v205 = vld [vmem:[%s177 + $0x78] sm:$0xff]
      %v206 = vld [vmem:[%s1] sm:$0xff]
      %v207 = vld [vmem:[%s1 + $0x8] sm:$0xff]
      %v208 = vld [vmem:[%s1 + $0x10] sm:$0xff]
      %v209 = vld [vmem:[%s1 + $0x18] sm:$0xff]
      %v210 = vld [vmem:[%s1 + $0x20] sm:$0xff]
      %v211 = vld [vmem:[%s1 + $0x28] sm:$0xff]
      %v212 = vld [vmem:[%s1 + $0x30] sm:$0xff]
      %v213 = vld [vmem:[%s1 + $0x38] sm:$0xff]
      %v214 = vld [vmem:[%s1 + $0x40] sm:$0xff]
      %v215 = vld [vmem:[%s1 + $0x48] sm:$0xff]
      %v216 = vld [vmem:[%s1 + $0x50] sm:$0xff]
      %v217 = vld [vmem:[%s1 + $0x58] sm:$0xff]
      %v218 = vld [vmem:[%s1 + $0x60] sm:$0xff]
      %v219 = vld [vmem:[%s1 + $0x68] sm:$0xff]
      %v220 = vld [vmem:[%s1 + $0x70] sm:$0xff]
      %v221 = vld [vmem:[%s1 + $0x78] sm:$0xff]
      %222 = vmatprep.subr.mxu0 0.0
      %223 = vmatpush1.msra.mxu0 %v206
      %224 = vmatprep.subr.mxu0 0.0
      %225 = vmatpush1.msra.mxu0 %v207
      %226 = vmatprep.subr.mxu0 0.0
      %227 = vmatpush1.msra.mxu0 %v208
      %228 = vmatprep.subr.mxu0 0.0
      %229 = vmatpush1.msra.mxu0 %v209
      %230 = vmatprep.subr.mxu0 0.0
      %231 = vmatpush1.msra.mxu0 %v210
      %232 = vmatprep.subr.mxu0 0.0
      %233 = vmatpush1.msra.mxu0 %v211
      %234 = vmatprep.subr.mxu0 0.0
      %235 = vmatpush1.msra.mxu0 %v212
      %236 = vmatprep.subr.mxu0 0.0
      %237 = vmatpush1.msra.mxu0 %v213
      %238 = vmatprep.subr.mxu0 0.0
      %239 = vmatpush1.msra.mxu0 %v214
      %240 = vmatprep.subr.mxu0 0.0
      %241 = vmatpush1.msra.mxu0 %v215
      %242 = vmatprep.subr.mxu0 0.0
      %243 = vmatpush1.msra.mxu0 %v216
      %244 = vmatprep.subr.mxu0 0.0
      %245 = vmatpush1.msra.mxu0 %v217
      %246 = vmatprep.subr.mxu0 0.0
      %247 = vmatpush1.msra.mxu0 %v218
      %248 = vmatprep.subr.mxu0 0.0
      %249 = vmatpush1.msra.mxu0 %v219
      %250 = vmatprep.subr.mxu0 0.0
      %251 = vmatpush1.msra.mxu0 %v220
      %252 = vmatprep.subr.mxu0 0.0
      %253 = vmatpush1.msra.mxu0 %v221
      %254 = vmatprep.subr.mxu0 0.0
      %255 = vmatpush1.msra.mxu0 0.0
      %256 = vmatprep.subr.mxu0 0.0
      %257 = vmatpush1.msra.mxu0 0.0
      %258 = vmatprep.subr.mxu0 0.0
      %259 = vmatpush1.msra.mxu0 0.0
      %260 = vmatprep.subr.mxu0 0.0
      %261 = vmatpush1.msra.mxu0 0.0
      %262 = vmatprep.subr.mxu0 0.0
      %263 = vmatpush1.msra.mxu0 0.0
      %264 = vmatprep.subr.mxu0 0.0
      %265 = vmatpush1.msra.mxu0 0.0
      %266 = vmatprep.subr.mxu0 0.0
      %267 = vmatpush1.msra.mxu0 0.0
      %268 = vmatprep.subr.mxu0 0.0
      %269 = vmatpush1.msra.mxu0 0.0
      %270 = vmatprep.subr.mxu0 0.0
      %271 = vmatpush1.msra.mxu0 0.0
      %272 = vmatprep.subr.mxu0 0.0
      %273 = vmatpush1.msra.mxu0 0.0
      %274 = vmatprep.subr.mxu0 0.0
      %275 = vmatpush1.msra.mxu0 0.0
      %276 = vmatprep.subr.mxu0 0.0
      %277 = vmatpush1.msra.mxu0 0.0
      %278 = vmatprep.subr.mxu0 0.0
      %279 = vmatpush1.msra.mxu0 0.0
      %280 = vmatprep.subr.mxu0 0.0
      %281 = vmatpush1.msra.mxu0 0.0
      %282 = vmatprep.subr.mxu0 0.0
      %283 = vmatpush1.msra.mxu0 0.0
      %284 = vmatprep.subr.mxu0 0.0
      %285 = vmatpush1.msra.mxu0 0.0
      %286 = vmatprep.mubr.f32.mxu0 0.0
      %287 = vmatmul.mubr.f32.gmra.mrb[0].mxu0 %v190
      %v288 = vpop.f32.mrb[0].mxu0
      %v289 = vadd.f32 0.0, %v288
      %v290 = vpop.f32.mrb[0].mxu0
      %291 = vmatprep.mubr.f32.mxu0 0.0
      %292 = vmatmul.mubr.f32.gmra.mrb[0].mxu0 %v191
      %v293 = vpop.f32.mrb[0].mxu0
      %v294 = vadd.f32 0.0, %v293
      %v295 = vpop.f32.mrb[0].mxu0
      %296 = vmatprep.mubr.f32.mxu0 0.0
      %297 = vmatmul.mubr.f32.gmra.mrb[0].mxu0 %v192
      %v298 = vpop.f32.mrb[0].mxu0
      %v299 = vadd.f32 0.0, %v298
      %v300 = vpop.f32.mrb[0].mxu0
      %301 = vmatprep.mubr.f32.mxu0 0.0
      %302 = vmatmul.mubr.f32.gmra.mrb[0].mxu0 %v193
      %v303 = vpop.f32.mrb[0].mxu0
      %v304 = vadd.f32 0.0, %v303
      %v305 = vpop.f32.mrb[0].mxu0
      %306 = vmatprep.mubr.f32.mxu0 0.0
      %307 = vmatmul.mubr.f32.gmra.mrb[0].mxu0 %v194
      %v308 = vpop.f32.mrb[0].mxu0
      %v309 = vadd.f32 0.0, %v308
      %v310 = vpop.f32.mrb[0].mxu0
      %311 = vmatprep.mubr.f32.mxu0 0.0
      %312 = vmatmul.mubr.f32.gmra.mrb[0].mxu0 %v195
      %v313 = vpop.f32.mrb[0].mxu0
      %v314 = vadd.f32 0.0, %v313
      %v315 = vpop.f32.mrb[0].mxu0
      %316 = vmatprep.mubr.f32.mxu0 0.0
      %317 = vmatmul.mubr.f32.gmra.mrb[0].mxu0 %v196
      %v318 = vpop.f32.mrb[0].mxu0
      %v319 = vadd.f32 0.0, %v318
      %v320 = vpop.f32.mrb[0].mxu0
      %321 = vmatprep.mubr.f32.mxu0 0.0
      %322 = vmatmul.mubr.f32.gmra.mrb[0].mxu0 %v197
      %v323 = vpop.f32.mrb[0].mxu0
      %v324 = vadd.f32 0.0, %v323
      %v325 = vpop.f32.mrb[0].mxu0
      %326 = vmatprep.mubr.f32.mxu0 0.0
      %327 = vmatmul.mubr.f32.gmra.mrb[0].mxu0 %v198
      %v328 = vpop.f32.mrb[0].mxu0
      %v329 = vadd.f32 0.0, %v328
      %v330 = vpop.f32.mrb[0].mxu0
      %331 = vmatprep.mubr.f32.mxu0 0.0
      %332 = vmatmul.mubr.f32.gmra.mrb[0].mxu0 %v199
      %v333 = vpop.f32.mrb[0].mxu0
      %v334 = vadd.f32 0.0, %v333
      %v335 = vpop.f32.mrb[0].mxu0
      %336 = vmatprep.mubr.f32.mxu0 0.0
      %337 = vmatmul.mubr.f32.gmra.mrb[0].mxu0 %v200
      %v338 = vpop.f32.mrb[0].mxu0
      %v339 = vadd.f32 0.0, %v338
      %v340 = vpop.f32.mrb[0].mxu0
      %341 = vmatprep.mubr.f32.mxu0 0.0
      %342 = vmatmul.mubr.f32.gmra.mrb[0].mxu0 %v201
      %v343 = vpop.f32.mrb[0].mxu0
      %v344 = vadd.f32 0.0, %v343
      %v345 = vpop.f32.mrb[0].mxu0
      %346 = vmatprep.mubr.f32.mxu0 0.0
      %347 = vmatmul.mubr.f32.gmra.mrb[0].mxu0 %v202
      %v348 = vpop.f32.mrb[0].mxu0
      %v349 = vadd.f32 0.0, %v348
      %v350 = vpop.f32.mrb[0].mxu0
      %351 = vmatprep.mubr.f32.mxu0 0.0
      %352 = vmatmul.mubr.f32.gmra.mrb[0].mxu0 %v203
      %v353 = vpop.f32.mrb[0].mxu0
      %v354 = vadd.f32 0.0, %v353
      %v355 = vpop.f32.mrb[0].mxu0
      %356 = vmatprep.mubr.f32.mxu0 0.0
      %357 = vmatmul.mubr.f32.gmra.mrb[0].mxu0 %v204
      %v358 = vpop.f32.mrb[0].mxu0
      %v359 = vadd.f32 0.0, %v358
      %v360 = vpop.f32.mrb[0].mxu0
      %361 = vmatprep.mubr.f32.mxu0 0.0
      %362 = vmatmul.mubr.f32.gmra.mrb[0].mxu0 %v205
      %v363 = vpop.f32.mrb[0].mxu0
      %v364 = vadd.f32 0.0, %v363
      %v365 = vpop.f32.mrb[0].mxu0
      %366 = vdwg.mxu0
      %367 = vst [vmem:[%s184] sm:$0xff] %v289
      %368 = vst [vmem:[%s184 + $0x8] sm:$0xff] %v294
      %369 = vst [vmem:[%s184 + $0x10] sm:$0xff] %v299
      %370 = vst [vmem:[%s184 + $0x18] sm:$0xff] %v304
      %371 = vst [vmem:[%s184 + $0x20] sm:$0xff] %v309
      %372 = vst [vmem:[%s184 + $0x28] sm:$0xff] %v314
      %373 = vst [vmem:[%s184 + $0x30] sm:$0xff] %v319
      %374 = vst [vmem:[%s184 + $0x38] sm:$0xff] %v324
      %375 = vst [vmem:[%s184 + $0x40] sm:$0xff] %v329
      %376 = vst [vmem:[%s184 + $0x48] sm:$0xff] %v334
      %377 = vst [vmem:[%s184 + $0x50] sm:$0xff] %v339
      %378 = vst [vmem:[%s184 + $0x58] sm:$0xff] %v344
      %379 = vst [vmem:[%s184 + $0x60] sm:$0xff] %v349
      %380 = vst [vmem:[%s184 + $0x68] sm:$0xff] %v354
      %381 = vst [vmem:[%s184 + $0x70] sm:$0xff] %v359
      %382 = vst [vmem:[%s184 + $0x78] sm:$0xff] %v364
      %v383 = vadd.f32 %v289, %v294
      %v384 = vadd.f32 %v383, %v299
      %v385 = vadd.f32 %v384, %v304
      %v386 = vadd.f32 %v385, %v309
      %v387 = vadd.f32 %v386, %v314
      %v388 = vadd.f32 %v387, %v319
      %v389 = vadd.f32 %v388, %v324
      %v390 = vadd.f32 %v389, %v329
      %v391 = vadd.f32 %v390, %v334
      %v392 = vadd.f32 %v391, %v339
      %v393 = vadd.f32 %v392, %v344
      %v394 = vadd.f32 %v393, %v349
      %v395 = vadd.f32 %v394, %v354
      %v396 = vadd.f32 %v395, %v359
      %v397 = vadd.f32 %v396, %v364
      %v398 = vrot.slane %v397, 4
      %v399 = vadd.f32 %v397, %v398
      %v400 = vrot.slane %v399, 2
      %v401 = vadd.f32 %v399, %v400
      %v402 = vrot.slane %v401, 1
      %v403 = vadd.f32 %v401, %v402
      %v404 = vmul.f32 %v289, %v289
      %v405 = vmul.f32 %v294, %v294
      %v406 = vmul.f32 %v299, %v299
      %v407 = vmul.f32 %v304, %v304
      %v408 = vmul.f32 %v309, %v309
      %v409 = vmul.f32 %v314, %v314
      %v410 = vmul.f32 %v319, %v319
      %v411 = vmul.f32 %v324, %v324
      %v412 = vmul.f32 %v329, %v329
      %v413 = vmul.f32 %v334, %v334
      %v414 = vmul.f32 %v339, %v339
      %v415 = vmul.f32 %v344, %v344
      %v416 = vmul.f32 %v349, %v349
      %v417 = vmul.f32 %v354, %v354
      %v418 = vmul.f32 %v359, %v359
      %v419 = vmul.f32 %v364, %v364
      %v420 = vadd.f32 %v404, %v405
      %v421 = vadd.f32 %v420, %v406
      %v422 = vadd.f32 %v421, %v407
      %v423 = vadd.f32 %v422, %v408
      %v424 = vadd.f32 %v423, %v409
      %v425 = vadd.f32 %v424, %v410
      %v426 = vadd.f32 %v425, %v411
      %v427 = vadd.f32 %v426, %v412
      %v428 = vadd.f32 %v427, %v413
      %v429 = vadd.f32 %v428, %v414
      %v430 = vadd.f32 %v429, %v415
      %v431 = vadd.f32 %v430, %v416
      %v432 = vadd.f32 %v431, %v417
      %v433 = vadd.f32 %v432, %v418
      %v434 = vadd.f32 %v433, %v419
      %v435 = vrot.slane %v434, 4
      %v436 = vadd.f32 %v434, %v435
      %v437 = vrot.slane %v436, 2
      %v438 = vadd.f32 %v436, %v437
      %v439 = vrot.slane %v438, 1
      %v440 = vadd.f32 %v438, %v439
      %vm441 = vcmask 1040384
      %v442 = vsel %vm441, %v403, %v440
      %443 = vst [vmem:[%s189] sm:$0x3] %v442
      %s444 = smul.u32 8, %s15
      %p445 = scmp.lt.s32.totalorder %s444, 31
      %s446 = scalar_select %p445, %s444, 31
      %s447 = smul.addr %s446, 2
      %s448 = smul.addr %s447, 8
      %s449 = scalar_lea.vmem %s2, %s448
      %p450 = scmp.lt.s32.totalorder %s15, 3
      %s451 = scalar_select %p450, %s15, 3
      %s452 = smul.addr %s451, 2
      %s453 = scalar_lea.vmem %s3, %s452
      // Predicated region
      $region29: #{unit_tcn_forward.2} parent=27 // pred_check
        %p454 = pneg %p80
      $region30: #{unit_tcn_forward.2} parent=27 // pred_check_branch
        %456 = sbr.rel (%p454) target = $region32
      $region31: #{unit_tcn_forward.2} parent=27 // pred_region
        %s457 = smul.u32 8, %s15
      $region32: #{unit_tcn_forward.2} parent=27 // pred_fallthru
        _
      // Predicated region
      $region33: #{unit_tcn_forward.2} parent=27 // pred_check
        %p458 = pneg %p106
      $region34: #{unit_tcn_forward.2} parent=27 // pred_check_branch
        %460 = sbr.rel (%p458) target = $region36
      $region35: #{unit_tcn_forward.2} parent=27 // pred_region
        _
      $region36: #{unit_tcn_forward.2} parent=27 // pred_fallthru
        _
    $region28: #{unit_tcn_forward.2} parent=5 // pred_fallthru
      _
    %p461 = scmp.le.s32.totalorder 2, %s10
    // Predicated region
    $region37: #{unit_tcn_forward.2} parent=5 // pred_check
      %p462 = pneg %p461
    $region38: #{unit_tcn_forward.2} parent=5 // pred_check_branch
      %464 = sbr.rel (%p462) target = $region40
    $region39: #{unit_tcn_forward.2} parent=5 // pred_region
      %s465 = ssub.s32 %s10, 2
      // Predicated region
      $region41: #{unit_tcn_forward.2} parent=39 // pred_check
        %p466 = pneg %p86
      $region42: #{unit_tcn_forward.2} parent=39 // pred_check_branch
        %468 = sbr.rel (%p466) target = $region44
      $region43: #{unit_tcn_forward.2} parent=39 // pred_region
        %s469 = smul.u32 8, %s16
        %p470 = scmp.lt.s32.totalorder %s469, 31
        %s471 = scalar_select %p470, %s469, 31
        %s472 = smul.addr %s471, 2
        %s473 = smul.addr %s472, 8
        %s474 = scalar_lea.vmem %s2, %s473
      $region44: #{unit_tcn_forward.2} parent=39 // pred_fallthru
        _
      // Predicated region
      $region45: #{unit_tcn_forward.2} parent=39 // pred_check
        %p475 = pneg %p112
      $region46: #{unit_tcn_forward.2} parent=39 // pred_check_branch
        %477 = sbr.rel (%p475) target = $region48
      $region47: #{unit_tcn_forward.2} parent=39 // pred_region
        %p478 = scmp.lt.s32.totalorder %s16, 3
        %s479 = scalar_select %p478, %s16, 3
        %s480 = smul.addr %s479, 2
        %s481 = scalar_lea.vmem %s3, %s480
      $region48: #{unit_tcn_forward.2} parent=39 // pred_fallthru
        _
    $region40: #{unit_tcn_forward.2} parent=5 // pred_fallthru
      _
  $region6: #{unit_tcn_forward.2} parent=0 // loop_footer
    %s14 = sadd.s32 1, %s10
  $region7: #{unit_tcn_forward.2} parent=0 // loop_footer_branch
    %9 = sbr.rel target = $region3
  $region8: #{unit_tcn_forward.2} parent=0 // loop_exit
    _

// kernel: unit_tcn_forward.3
$region0: #{unit_tcn_forward.3}
  #allocation0 [shape = 'u32[]', space=smem, size = 0x4, offset = 0x4, fixed_abs, tag = 'smem constant byte address 0x4 - core index']
  #allocation1 [shape = 'u32[144,128]{1,0:T(1,128)}', space=vmem, size = 0x12000, scoped, tag = 'internal scratch']
  %s0 = inlined_call_operand.vmem [shape: f32[512,128], index: 0, kind: input, shape index: {}, may-alias: {0,3}]
  %s1 = inlined_call_operand.vmem [shape: f32[1,128], index: 1, kind: input, shape index: {}]
  %s2 = inlined_call_operand.vmem [shape: f32[1,128], index: 2, kind: input, shape index: {}]
  %s3 = inlined_call_operand.vmem [shape: f32[512,128], index: 3, kind: output, shape index: {}, may-alias: {0,3}]
  %s4 = sld [smem:[#allocation0]]
  $region45: #{unit_tcn_forward.3} parent=0
    _
  %s6 = ssub.s32 1, %s4
  %s7 = scalar_select 0, %s6, %s4
  loop: start=0, step=1, limit=4
  $region2: #{unit_tcn_forward.3} parent=0 // loop_pre_header
    _
  $region3: #{unit_tcn_forward.3} parent=0 // loop_header
    %s9 = sphi 0, %s13
    %p10 = scmp.ge.s32.totalorder %s9, 4
    %s19 = sphi 0, %s21
    %s22 = sphi 0, %s19
    %s23 = sphi 0, %s22
    %s39 = sphi 0, %s23
    %s43 = sphi 0, %s43
    %s45 = sphi 0, %s43
    %s46 = sphi 0, %s45
    %s60 = sphi 0, %s46
    %s64 = sphi 0, %s64
    %s66 = sphi 0, %s64
    %s67 = sphi 0, %s66
    %s81 = sphi 0, %s67
    %s87 = sphi 0, %s89
    %s90 = sphi 0, %s87
    %s91 = sphi 0, %s90
    %s107 = sphi 0, %s91
  $region4: #{unit_tcn_forward.3} parent=0 // loop_header_branch
    %12 = sbr.rel (%p10) target = $region8
  $region5: #{unit_tcn_forward.3} parent=0 // loop_body
    %s14 = ssub.s32 %s9, 1
    %s15 = ssub.s32 %s9, 2
    %s16 = sadd.s32 %s9, 1
    %s17 = ssub.s32 %s9, %s16
    %p18 = scmp.eq.s32.totalorder %s17, 0
    %s20 = sadd.s32 %s19, 1
    %s21 = scalar_select %p18, %s19, %s20
    %p24 = pneg %p18
    %p25 = scmp.eq.s32.totalorder %s9, 1
    %p26 = por %p24, %p25
    %p27 = scmp.ne.s32.totalorder %s19, %s22
    %p28 = scmp.eq.s32.totalorder %s9, 0
    %p29 = por %p27, %p28
    %p30 = scmp.ne.s32.totalorder %s19, %s22
    %p31 = scmp.eq.s32.totalorder %s14, 1
    %p32 = por %p30, %p31
    %p33 = scmp.ne.s32.totalorder %s22, %s23
    %p34 = scmp.eq.s32.totalorder %s14, 0
    %p35 = por %p33, %p34
    %p36 = scmp.ne.s32.totalorder %s22, %s23
    %p37 = scmp.eq.s32.totalorder %s15, 1
    %p38 = por %p36, %p37
    %p40 = scmp.ne.s32.totalorder %s23, %s39
    %p41 = scmp.eq.s32.totalorder %s15, 0
    %p42 = por %p40, %p41
    %s44 = sadd.s32 %s43, 1
    %p47 = scmp.eq.s32.totalorder %s9, 1
    %p48 = scmp.ne.s32.totalorder %s43, %s45
    %p49 = scmp.eq.s32.totalorder %s9, 0
    %p50 = por %p48, %p49
    %p51 = scmp.ne.s32.totalorder %s43, %s45
    %p52 = scmp.eq.s32.totalorder %s14, 1
    %p53 = por %p51, %p52
    %p54 = scmp.ne.s32.totalorder %s45, %s46
    %p55 = scmp.eq.s32.totalorder %s14, 0
    %p56 = por %p54, %p55
    %p57 = scmp.ne.s32.totalorder %s45, %s46
    %p58 = scmp.eq.s32.totalorder %s15, 1
    %p59 = por %p57, %p58
    %p61 = scmp.ne.s32.totalorder %s46, %s60
    %p62 = scmp.eq.s32.totalorder %s15, 0
    %p63 = por %p61, %p62
    %s65 = sadd.s32 %s64, 1
    %p68 = scmp.eq.s32.totalorder %s9, 1
    %p69 = scmp.ne.s32.totalorder %s64, %s66
    %p70 = scmp.eq.s32.totalorder %s9, 0
    %p71 = por %p69, %p70
    %p72 = scmp.ne.s32.totalorder %s64, %s66
    %p73 = scmp.eq.s32.totalorder %s14, 1
    %p74 = por %p72, %p73
    %p75 = scmp.ne.s32.totalorder %s66, %s67
    %p76 = scmp.eq.s32.totalorder %s14, 0
    %p77 = por %p75, %p76
    %p78 = scmp.ne.s32.totalorder %s66, %s67
    %p79 = scmp.eq.s32.totalorder %s15, 1
    %p80 = por %p78, %p79
    %p82 = scmp.ne.s32.totalorder %s67, %s81
    %p83 = scmp.eq.s32.totalorder %s15, 0
    %p84 = por %p82, %p83
    %s85 = ssub.s32 %s9, %s16
    %p86 = scmp.eq.s32.totalorder %s85, 0
    %s88 = sadd.s32 %s87, 1
    %s89 = scalar_select %p86, %s87, %s88
    %p92 = pneg %p86
    %p93 = scmp.eq.s32.totalorder %s9, 1
    %p94 = por %p92, %p93
    %p95 = scmp.ne.s32.totalorder %s87, %s90
    %p96 = scmp.eq.s32.totalorder %s9, 0
    %p97 = por %p95, %p96
    %p98 = scmp.ne.s32.totalorder %s87, %s90
    %p99 = scmp.eq.s32.totalorder %s14, 1
    %p100 = por %p98, %p99
    %p101 = scmp.ne.s32.totalorder %s90, %s91
    %p102 = scmp.eq.s32.totalorder %s14, 0
    %p103 = por %p101, %p102
    %p104 = scmp.ne.s32.totalorder %s90, %s91
    %p105 = scmp.eq.s32.totalorder %s15, 1
    %p106 = por %p104, %p105
    %p108 = scmp.ne.s32.totalorder %s91, %s107
    %p109 = scmp.eq.s32.totalorder %s15, 0
    %p110 = por %p108, %p109
    %p111 = scmp.le.s32.totalorder 1, %s9
    %p112 = scmp.lt.s32.totalorder %s9, 3
    %p113 = pnand %p111, %p112
    %p114 = pneg %p113
    // Predicated region
    $region9: #{unit_tcn_forward.3} parent=5 // pred_check
      _
    $region10: #{unit_tcn_forward.3} parent=5 // pred_check_branch
      %116 = sbr.rel (%p113) target = $region12
    $region11: #{unit_tcn_forward.3} parent=5 // pred_region
      %s117 = ssub.s32 %s9, 1
      // Predicated region
      $region13: #{unit_tcn_forward.3} parent=11 // pred_check
        %p118 = pneg %p56
      $region14: #{unit_tcn_forward.3} parent=11 // pred_check_branch
        %120 = sbr.rel (%p118) target = $region16
      $region15: #{unit_tcn_forward.3} parent=11 // pred_region
        _
      $region16: #{unit_tcn_forward.3} parent=11 // pred_fallthru
        _
      // Predicated region
      $region17: #{unit_tcn_forward.3} parent=11 // pred_check
        %p121 = pneg %p77
      $region18: #{unit_tcn_forward.3} parent=11 // pred_check_branch
        %123 = sbr.rel (%p121) target = $region20
      $region19: #{unit_tcn_forward.3} parent=11 // pred_region
        _
      $region20: #{unit_tcn_forward.3} parent=11 // pred_fallthru
        _
    $region12: #{unit_tcn_forward.3} parent=5 // pred_fallthru
      _
    %p124 = scmp.lt.s32.totalorder %s9, 2
    // Predicated region
    $region21: #{unit_tcn_forward.3} parent=5 // pred_check
      %p125 = pneg %p124
    $region22: #{unit_tcn_forward.3} parent=5 // pred_check_branch
      %127 = sbr.rel (%p125) target = $region24
    $region23: #{unit_tcn_forward.3} parent=5 // pred_region
      // Predicated region
      $region25: #{unit_tcn_forward.3} parent=23 // pred_check
        %p128 = pneg %p29
      $region26: #{unit_tcn_forward.3} parent=23 // pred_check_branch
        %130 = sbr.rel (%p128) target = $region28
      $region27: #{unit_tcn_forward.3} parent=23 // pred_region
        %s131 = smul.u32 32, %s9
        %p132 = scmp.lt.s32.totalorder %s131, 63
        %s133 = scalar_select %p132, %s131, 63
        %s134 = smul.addr %s133, 8
        %s135 = scalar_lea.vmem %s0, %s134
        %s136 = smul.u32 32, %s9
      $region28: #{unit_tcn_forward.3} parent=23 // pred_fallthru
        _
    $region24: #{unit_tcn_forward.3} parent=5 // pred_fallthru
      _
    %p137 = scmp.le.s32.totalorder 1, %s9
    %p138 = scmp.lt.s32.totalorder %s9, 3
    %p139 = pnand %p137, %p138
    %p140 = pneg %p139
    // Predicated region
    $region29: #{unit_tcn_forward.3} parent=5 // pred_check
      _
    $region30: #{unit_tcn_forward.3} parent=5 // pred_check_branch
      %142 = sbr.rel (%p139) target = $region32
    $region31: #{unit_tcn_forward.3} parent=5 // pred_region
      %s143 = ssub.s32 %s9, 1
      %s144 = smul.u32 32, %s14
      %p145 = scmp.lt.s32.totalorder %s144, 63
      %s146 = scalar_select %p145, %s144, 63
      %s147 = smul.addr %s146, 8
      %s148 = scalar_lea.vmem %s0, %s147
      %p149 = pneg %p35
      %p150 = pneg %p32
      %p151 = pneg %p56
      %p152 = pneg %p53
      %p153 = pneg %p77
      %p154 = pneg %p74
      %p155 = pneg %p103
      %p156 = pneg %p100
      %s157 = smul.u32 32, %s14
      %p158 = scmp.lt.s32.totalorder %s157, 63
      %s159 = scalar_select %p158, %s157, 63
      %s160 = smul.addr %s159, 8
      %s161 = scalar_lea.vmem %s3, %s160
      %s162 = smul.u32 32, %s14
      %p163 = scmp.lt.s32.totalorder %s162, 63
      %s164 = scalar_select %p163, %s162, 63
      %s165 = smul.addr %s164, 8
      %s166 = scalar_lea.vmem %s0, %s165
      %s167 = smul.u32 32, %s14
      %s168 = smul.u32 32, %s14
      %p169 = scmp.lt.s32.totalorder %s168, 63
      %s170 = scalar_select %p169, %s168, 63
      %s171 = smul.addr %s170, 8
      %s172 = scalar_lea.vmem %s3, %s171
      %s173 = smul.u32 32, %s14
      %v174 = vld [vmem:[%s166] sm:$0xff]
      %v175 = vld [vmem:[%s166 + $0x8] sm:$0xff]
      %v176 = vld [vmem:[%s166 + $0x10] sm:$0xff]
      %v177 = vld [vmem:[%s166 + $0x18] sm:$0xff]
      %v178 = vld [vmem:[%s166 + $0x20] sm:$0xff]
      %v179 = vld [vmem:[%s166 + $0x28] sm:$0xff]
      %v180 = vld [vmem:[%s166 + $0x30] sm:$0xff]
      %v181 = vld [vmem:[%s166 + $0x38] sm:$0xff]
      %v182 = vld [vmem:[%s166 + $0x40] sm:$0xff]
      %v183 = vld [vmem:[%s166 + $0x48] sm:$0xff]
      %v184 = vld [vmem:[%s166 + $0x50] sm:$0xff]
      %v185 = vld [vmem:[%s166 + $0x58] sm:$0xff]
      %v186 = vld [vmem:[%s166 + $0x60] sm:$0xff]
      %v187 = vld [vmem:[%s166 + $0x68] sm:$0xff]
      %v188 = vld [vmem:[%s166 + $0x70] sm:$0xff]
      %v189 = vld [vmem:[%s166 + $0x78] sm:$0xff]
      %v190 = vld [vmem:[%s166 + $0x80] sm:$0xff]
      %v191 = vld [vmem:[%s166 + $0x88] sm:$0xff]
      %v192 = vld [vmem:[%s166 + $0x90] sm:$0xff]
      %v193 = vld [vmem:[%s166 + $0x98] sm:$0xff]
      %v194 = vld [vmem:[%s166 + $0xa0] sm:$0xff]
      %v195 = vld [vmem:[%s166 + $0xa8] sm:$0xff]
      %v196 = vld [vmem:[%s166 + $0xb0] sm:$0xff]
      %v197 = vld [vmem:[%s166 + $0xb8] sm:$0xff]
      %v198 = vld [vmem:[%s166 + $0xc0] sm:$0xff]
      %v199 = vld [vmem:[%s166 + $0xc8] sm:$0xff]
      %v200 = vld [vmem:[%s166 + $0xd0] sm:$0xff]
      %v201 = vld [vmem:[%s166 + $0xd8] sm:$0xff]
      %v202 = vld [vmem:[%s166 + $0xe0] sm:$0xff]
      %v203 = vld [vmem:[%s166 + $0xe8] sm:$0xff]
      %v204 = vld [vmem:[%s166 + $0xf0] sm:$0xff]
      %v205 = vld [vmem:[%s166 + $0xf8] sm:$0xff]
      %v206 = vld [vmem:[%s1] sm:$0x1]
      %v208 = vlaneseq
      %v209 = vshrl.u32 %v208, 7
      %v210 = vsub.s32 0, %v209
      %v211 = vrot.slane %v206, %v210
      %v213 = vmul.f32 %v174, %v211
      %v214 = vmul.f32 %v175, %v211
      %v215 = vmul.f32 %v176, %v211
      %v216 = vmul.f32 %v177, %v211
      %v217 = vmul.f32 %v178, %v211
      %v218 = vmul.f32 %v179, %v211
      %v219 = vmul.f32 %v180, %v211
      %v220 = vmul.f32 %v181, %v211
      %v221 = vmul.f32 %v182, %v211
      %v222 = vmul.f32 %v183, %v211
      %v223 = vmul.f32 %v184, %v211
      %v224 = vmul.f32 %v185, %v211
      %v225 = vmul.f32 %v186, %v211
      %v226 = vmul.f32 %v187, %v211
      %v227 = vmul.f32 %v188, %v211
      %v228 = vmul.f32 %v189, %v211
      %v229 = vmul.f32 %v190, %v211
      %v230 = vmul.f32 %v191, %v211
      %v231 = vmul.f32 %v192, %v211
      %v232 = vmul.f32 %v193, %v211
      %v233 = vmul.f32 %v194, %v211
      %v234 = vmul.f32 %v195, %v211
      %v235 = vmul.f32 %v196, %v211
      %v236 = vmul.f32 %v197, %v211
      %v237 = vmul.f32 %v198, %v211
      %v238 = vmul.f32 %v199, %v211
      %v239 = vmul.f32 %v200, %v211
      %v240 = vmul.f32 %v201, %v211
      %v241 = vmul.f32 %v202, %v211
      %v242 = vmul.f32 %v203, %v211
      %v243 = vmul.f32 %v204, %v211
      %v244 = vmul.f32 %v205, %v211
      %v245 = vld [vmem:[%s2] sm:$0x1]
      %v247 = vlaneseq
      %v248 = vshrl.u32 %v247, 7
      %v249 = vsub.s32 0, %v248
      %v250 = vrot.slane %v245, %v249
      %v252 = vadd.f32 %v213, %v250
      %v253 = vadd.f32 %v214, %v250
      %v254 = vadd.f32 %v215, %v250
      %v255 = vadd.f32 %v216, %v250
      %v256 = vadd.f32 %v217, %v250
      %v257 = vadd.f32 %v218, %v250
      %v258 = vadd.f32 %v219, %v250
      %v259 = vadd.f32 %v220, %v250
      %v260 = vadd.f32 %v221, %v250
      %v261 = vadd.f32 %v222, %v250
      %v262 = vadd.f32 %v223, %v250
      %v263 = vadd.f32 %v224, %v250
      %v264 = vadd.f32 %v225, %v250
      %v265 = vadd.f32 %v226, %v250
      %v266 = vadd.f32 %v227, %v250
      %v267 = vadd.f32 %v228, %v250
      %v268 = vadd.f32 %v229, %v250
      %v269 = vadd.f32 %v230, %v250
      %v270 = vadd.f32 %v231, %v250
      %v271 = vadd.f32 %v232, %v250
      %v272 = vadd.f32 %v233, %v250
      %v273 = vadd.f32 %v234, %v250
      %v274 = vadd.f32 %v235, %v250
      %v275 = vadd.f32 %v236, %v250
      %v276 = vadd.f32 %v237, %v250
      %v277 = vadd.f32 %v238, %v250
      %v278 = vadd.f32 %v239, %v250
      %v279 = vadd.f32 %v240, %v250
      %v280 = vadd.f32 %v241, %v250
      %v281 = vadd.f32 %v242, %v250
      %v282 = vadd.f32 %v243, %v250
      %v283 = vadd.f32 %v244, %v250
      %284 = vst [vmem:[%s172] sm:$0xff] %v252
      %285 = vst [vmem:[%s172 + $0x8] sm:$0xff] %v253
      %286 = vst [vmem:[%s172 + $0x10] sm:$0xff] %v254
      %287 = vst [vmem:[%s172 + $0x18] sm:$0xff] %v255
      %288 = vst [vmem:[%s172 + $0x20] sm:$0xff] %v256
      %289 = vst [vmem:[%s172 + $0x28] sm:$0xff] %v257
      %290 = vst [vmem:[%s172 + $0x30] sm:$0xff] %v258
      %291 = vst [vmem:[%s172 + $0x38] sm:$0xff] %v259
      %292 = vst [vmem:[%s172 + $0x40] sm:$0xff] %v260
      %293 = vst [vmem:[%s172 + $0x48] sm:$0xff] %v261
      %294 = vst [vmem:[%s172 + $0x50] sm:$0xff] %v262
      %295 = vst [vmem:[%s172 + $0x58] sm:$0xff] %v263
      %296 = vst [vmem:[%s172 + $0x60] sm:$0xff] %v264
      %297 = vst [vmem:[%s172 + $0x68] sm:$0xff] %v265
      %298 = vst [vmem:[%s172 + $0x70] sm:$0xff] %v266
      %299 = vst [vmem:[%s172 + $0x78] sm:$0xff] %v267
      %300 = vst [vmem:[%s172 + $0x80] sm:$0xff] %v268
      %301 = vst [vmem:[%s172 + $0x88] sm:$0xff] %v269
      %302 = vst [vmem:[%s172 + $0x90] sm:$0xff] %v270
      %303 = vst [vmem:[%s172 + $0x98] sm:$0xff] %v271
      %304 = vst [vmem:[%s172 + $0xa0] sm:$0xff] %v272
      %305 = vst [vmem:[%s172 + $0xa8] sm:$0xff] %v273
      %306 = vst [vmem:[%s172 + $0xb0] sm:$0xff] %v274
      %307 = vst [vmem:[%s172 + $0xb8] sm:$0xff] %v275
      %308 = vst [vmem:[%s172 + $0xc0] sm:$0xff] %v276
      %309 = vst [vmem:[%s172 + $0xc8] sm:$0xff] %v277
      %310 = vst [vmem:[%s172 + $0xd0] sm:$0xff] %v278
      %311 = vst [vmem:[%s172 + $0xd8] sm:$0xff] %v279
      %312 = vst [vmem:[%s172 + $0xe0] sm:$0xff] %v280
      %313 = vst [vmem:[%s172 + $0xe8] sm:$0xff] %v281
      %314 = vst [vmem:[%s172 + $0xf0] sm:$0xff] %v282
      %315 = vst [vmem:[%s172 + $0xf8] sm:$0xff] %v283
      %s316 = smul.u32 32, %s14
      %p317 = scmp.lt.s32.totalorder %s316, 63
      %s318 = scalar_select %p317, %s316, 63
      %s319 = smul.addr %s318, 8
      %s320 = scalar_lea.vmem %s3, %s319
      // Predicated region
      $region33: #{unit_tcn_forward.3} parent=31 // pred_check
        %p321 = pneg %p100
      $region34: #{unit_tcn_forward.3} parent=31 // pred_check_branch
        %323 = sbr.rel (%p321) target = $region36
      $region35: #{unit_tcn_forward.3} parent=31 // pred_region
        %s324 = smul.u32 32, %s14
      $region36: #{unit_tcn_forward.3} parent=31 // pred_fallthru
        _
    $region32: #{unit_tcn_forward.3} parent=5 // pred_fallthru
      _
    %p325 = scmp.le.s32.totalorder 2, %s9
    // Predicated region
    $region37: #{unit_tcn_forward.3} parent=5 // pred_check
      %p326 = pneg %p325
    $region38: #{unit_tcn_forward.3} parent=5 // pred_check_branch
      %328 = sbr.rel (%p326) target = $region40
    $region39: #{unit_tcn_forward.3} parent=5 // pred_region
      %s329 = ssub.s32 %s9, 2
      // Predicated region
      $region41: #{unit_tcn_forward.3} parent=39 // pred_check
        %p330 = pneg %p106
      $region42: #{unit_tcn_forward.3} parent=39 // pred_check_branch
        %332 = sbr.rel (%p330) target = $region44
      $region43: #{unit_tcn_forward.3} parent=39 // pred_region
        %s333 = smul.u32 32, %s15
        %p334 = scmp.lt.s32.totalorder %s333, 63
        %s335 = scalar_select %p334, %s333, 63
        %s336 = smul.addr %s335, 8
        %s337 = scalar_lea.vmem %s3, %s336
      $region44: #{unit_tcn_forward.3} parent=39 // pred_fallthru
        _
    $region40: #{unit_tcn_forward.3} parent=5 // pred_fallthru
      _
  $region6: #{unit_tcn_forward.3} parent=0 // loop_footer
    %s13 = sadd.s32 1, %s9
  $region7: #{unit_tcn_forward.3} parent=0 // loop_footer_branch
    %8 = sbr.rel target = $region3
  $region8: #{unit_tcn_forward.3} parent=0 // loop_exit
    _

</llo_original>
